<compile_context>
chip_gen: v7x
topology: tpu7x:2x2x1
jax: 0.10.0
libtpu: 0.0.40
codegen_flags: <defaults>
</compile_context>

<pallas_src>
import functools

import jax
import jax.numpy as jnp
from jax.experimental import pallas as pl
from jax.experimental.pallas import tpu as pltpu


def _bits_to_uniform_kernel(bits_ref, out_ref):
    """Convert raw 32-bit random words into Uniform[0,1) float32.

    bits_ref : VMEM int32[block_rows, lane_width]  raw random bits
    out_ref  : VMEM float32[block_rows, lane_width] uniforms in [0, 1)
    """
    bits = bits_ref[...]
    # Keep the top 24 bits (logical shift so the sign bit does not smear):
    # an integer in [0, 2^24) is exactly representable in f32.  Scale by
    # 2^-24 -> Uniform[0, 1) with 24-bit resolution (same as torch.rand).
    top24 = jax.lax.shift_right_logical(bits, 8)
    out_ref[...] = top24.astype(jnp.float32) * jnp.float32(1.0 / (1 << 24))


@functools.partial(
    jax.jit,
    static_argnames=("buffer_size", "n_support", "block_rows", "lane_width"))
def quantile_maker(key, buffer_size: int, n_support: int = 64,
                   block_rows: int = 1024, lane_width: int = 512):
    """Pallas equivalent of Qunatile_Maker.forward(buffer_size)."""
    n = buffer_size * n_support

    # Lane-dense generation shape (rows, lane_width); pad rows so the grid
    # divides evenly, then trim the (i.i.d.) tail in the wrapper.
    rows = pl.cdiv(n, lane_width)
    if rows <= block_rows:
        br = rows                       # single full-array block (no (8,128) issue)
        rows_padded = rows
    else:
        br = block_rows                 # 1024 x 512 f32 = 2 MiB per block
        rows_padded = pl.cdiv(rows, br) * br

    # Counter-based random bits (tiling-invariant, reproducible), reinterpreted
    # as int32 so the in-kernel ops stay on the plain int32 VPU path.
    bits_u32 = jax.random.bits(key, (rows_padded, lane_width), dtype=jnp.uint32)
    bits_i32 = jax.lax.bitcast_convert_type(bits_u32, jnp.int32)

    grid = (rows_padded // br,)

    flat = pl.pallas_call(
        _bits_to_uniform_kernel,
        out_shape=jax.ShapeDtypeStruct((rows_padded, lane_width), jnp.float32),
        grid=grid,
        in_specs=[pl.BlockSpec((br, lane_width), lambda i: (i, 0))],
        out_specs=pl.BlockSpec((br, lane_width), lambda i: (i, 0)),
        compiler_params=pltpu.CompilerParams(
            dimension_semantics=("parallel",),   # independent tiles -> megacore OK
        ),
        cost_estimate=pl.CostEstimate(
            flops=0,
            transcendentals=0,
            bytes_accessed=2 * rows_padded * lane_width * 4,  # read bits + write f32
        ),
    )(bits_i32)

    # Free row-major reshape back to the module's output layout.
    return flat.reshape(-1)[:n].reshape(buffer_size, n_support)


if __name__ == "__main__":
    # Module config: n_support=64 (default of Qunatile_Maker.__init__); the
    # module has no learnable parameters (dummy_param is empty).
    n_support = 64
    buffer_size = 16        # small "batch" of quantile rows

    key = jax.random.PRNGKey(0)

    out = quantile_maker(key, buffer_size, n_support)
    out = jax.block_until_ready(out)

    # Sanity checks matching torch.rand semantics.
    assert out.shape == (buffer_size, n_support)
    assert out.dtype == jnp.float32
    assert bool(jnp.all(out >= 0.0)) and bool(jnp.all(out < 1.0))

    print("KERNEL_OK")
</pallas_src>

<mosaic_0001>
module attributes {stable_mosaic.version = 11 : i64} {
  func.func @_bits_to_uniform_kernel(%arg0: i32, %arg1: memref<2x512xi32, #tpu.memory_space<vmem>>, %arg2: memref<2x512xf32, #tpu.memory_space<vmem>>) attributes {dimension_semantics = [#tpu.dimension_semantics<parallel>], iteration_bounds = array<i64: 1>, scalar_prefetch = 0 : i64, scratch_operands = 0 : i64, tpu.core_type = #tpu.core_type<tc>, window_params = [{transform_indices = @transform_0, window_bounds = array<i64: 2, 512>}, {transform_indices = @transform_1, window_bounds = array<i64: 2, 512>}]} {
    %c0 = arith.constant 0 : index
    %c0_0 = arith.constant 0 : index
    %0 = vector.load %arg1[%c0, %c0_0] : memref<2x512xi32, #tpu.memory_space<vmem>>, vector<2x512xi32>
    %c8_i32 = arith.constant 8 : i32
    %1 = vector.broadcast %c8_i32 : i32 to vector<2x512xi32>
    %2 = arith.shrui %0, %1 : vector<2x512xi32>
    %3 = arith.sitofp %2 : vector<2x512xi32> to vector<2x512xf32>
    %cst = arith.constant 5.96046448E-8 : f32
    %4 = vector.broadcast %cst : f32 to vector<2x512xf32>
    %5 = arith.mulf %3, %4 : vector<2x512xf32>
    %c0_1 = arith.constant 0 : index
    %c0_2 = arith.constant 0 : index
    %6 = vector.load %arg2[%c0_1, %c0_2] : memref<2x512xf32, #tpu.memory_space<vmem>>, vector<2x512xf32>
    tpu.vector_store %arg2[%c0_1, %c0_2], %5 {strides = array<i32>} : memref<2x512xf32, #tpu.memory_space<vmem>>, vector<2x512xf32>,
    return
  }
  func.func @transform_0(%arg0: i32) -> (i32, i32) {
    %c0_i32 = arith.constant 0 : i32
    %c0_i32_0 = arith.constant 0 : i32
    return %arg0, %c0_i32 : i32, i32
  }
  func.func @transform_1(%arg0: i32) -> (i32, i32) {
    %c0_i32 = arith.constant 0 : i32
    %c0_i32_0 = arith.constant 0 : i32
    return %arg0, %c0_i32 : i32, i32
  }
}

</mosaic_0001>

<llo_original>
// kernel: quantile_maker.1
$region0: #{quantile_maker.1}
  #allocation0 [shape = 'u32[]', space=smem, size = 0x4, offset = 0x4, fixed_abs, tag = 'smem constant byte address 0x4 - core index']
  #allocation1 [shape = 'u32[144,128]{1,0:T(1,128)}', space=vmem, size = 0x12000, scoped, tag = 'internal scratch']
  %s0 = inlined_call_operand.vmem [shape: s32[2,512], index: 0, kind: input, shape index: {}]
  %s1 = inlined_call_operand.vmem [shape: f32[2,512], index: 1, kind: output, shape index: {}]
  %s2 = sld [smem:[#allocation0]]
  $region14: #{quantile_maker.1} parent=0
    _
  %s4 = ssub.s32 1, %s2
  %s5 = scalar_select 0, %s4, %s2
  // Predicated region
  $region2: #{quantile_maker.1} parent=0 // pred_check
    _
  $region3: #{quantile_maker.1} parent=0 // pred_check_branch
    %7 = sbr.rel (0) target = $region5
  $region4: #{quantile_maker.1} parent=0 // pred_region
    _
  $region5: #{quantile_maker.1} parent=0 // pred_fallthru
    _
  %v8 = vld [vmem:[%s0] sm:$0xff]
  %v9 = vshrl.u32 %v8, 8
  %v10 = vcvt.s32.f32 %v9
  %v11 = vmul.f32 %v10, 5.9604645e-08
  %12 = vst [vmem:[%s1] sm:$0xff] %v11
  // Predicated region
  $region6: #{quantile_maker.1} parent=0 // pred_check
    _
  $region7: #{quantile_maker.1} parent=0 // pred_check_branch
    %14 = sbr.rel (0) target = $region9
  $region8: #{quantile_maker.1} parent=0 // pred_region
    _
  $region9: #{quantile_maker.1} parent=0 // pred_fallthru
    _
  // Predicated region
  $region10: #{quantile_maker.1} parent=0 // pred_check
    _
  $region11: #{quantile_maker.1} parent=0 // pred_check_branch
    %16 = sbr.rel (0) target = $region13
  $region12: #{quantile_maker.1} parent=0 // pred_region
    _
  $region13: #{quantile_maker.1} parent=0 // pred_fallthru
    _

</llo_original>
